<compile_context>
chip_gen: v7x
topology: tpu7x:2x2x1
jax: 0.10.0
libtpu: 0.0.40
codegen_flags: <defaults>
</compile_context>

<pallas_src>
import functools

import jax
import jax.numpy as jnp
from jax.experimental import pallas as pl
from jax.experimental.pallas import tpu as pltpu

_LANE = 128
_SUB = 8


def _detect_num_tensorcores():
    """Best-effort TensorCores-per-chip (2 on v7x, else 1). Never raises."""
    try:
        info = pltpu.get_tpu_info()
        for attr in ("num_cores", "core_count", "num_tensorcores",
                     "tensorcores_per_chip", "num_tensor_cores"):
            n = getattr(info, attr, None)
            if isinstance(n, int) and 1 <= n <= 8:
                return n
    except Exception:
        pass
    try:
        kind = jax.devices()[0].device_kind.lower().replace(" ", "")
        if "v7" in kind or "tpu7" in kind:
            return 2
    except Exception:
        pass
    return 1


def _ae_mse_kernel(x_ref, y_ref, o_ref, *, rows_total, r_blk, acc_rows,
                   n_inner, need_mask, unroll):
    c = pl.program_id(0)   # core split (parallel)
    i = pl.program_id(1)   # streaming reduction axis (arbitrary)

    # The output block index depends only on c, so o_ref is resident across
    # the whole i axis: zero it once, accumulate into it directly.
    @pl.when(i == 0)
    def _init():
        o_ref[...] = jnp.zeros_like(o_ref)

    n_slabs = r_blk // acc_rows
    row0 = (c * n_inner + i) * r_blk        # logical start row of this step

    def _accumulate(masked):
        def slab(j, acc):
            r0 = pl.multiple_of(j * acc_rows, acc_rows)
            d = (x_ref[pl.ds(r0, acc_rows), :].astype(jnp.float32)
                 - y_ref[pl.ds(r0, acc_rows), :].astype(jnp.float32))
            d2 = d * d
            if masked:
                # Rows at/after rows_total are either block padding past the
                # array edge or a clamped duplicate block: zero them. where()
                # has select semantics, so garbage/NaN in the unselected lane
                # cannot leak through.
                rid = (row0 + r0
                       + jax.lax.broadcasted_iota(jnp.int32, (acc_rows, _LANE), 0))
                d2 = jnp.where(rid < rows_total, d2, 0.0)
            return acc + d2

        acc = jax.lax.fori_loop(0, n_slabs, slab,
                                jnp.zeros((acc_rows, _LANE), jnp.float32),
                                unroll=unroll)
        o_ref[...] += acc

    if need_mask:
        # At most one edge step per core split pays the mask; all interior
        # steps take the pure sub/mul/add path.
        is_edge = row0 + r_blk > rows_total

        @pl.when(jnp.logical_not(is_edge))
        def _interior():
            _accumulate(masked=False)

        @pl.when(is_edge)
        def _edge():
            _accumulate(masked=True)
    else:
        _accumulate(masked=False)


def ae_loss_mse(input_data, output_data, *, block_rows=8192, acc_rows=64,
                num_core_splits=None, allow_fast_path=True,
                fast_path_max_bytes=1 << 20):
    """0.5 * mean_b( sum_{c,h,w} (input - output)^2 ), NCHW inputs."""
    assert input_data.shape == output_data.shape
    B = input_data.shape[0]
    N = input_data.size
    itemsize = jnp.dtype(input_data.dtype).itemsize

    # Small-input fast path: kernel launch + pipeline warmup dominates tiny
    # tensors; plain XLA is faster and exact.
    if allow_fast_path and N * itemsize <= fast_path_max_bytes:
        d = input_data.astype(jnp.float32) - output_data.astype(jnp.float32)
        return (0.5 / B) * jnp.sum(d * d)

    num_splits = (num_core_splits if num_core_splits is not None
                  else _detect_num_tensorcores())
    num_splits = max(1, int(num_splits))

    # Sublane multiple required by the dtype's min tile: f32->8, bf16->16,
    # int8/fp8->32.
    sub_mult = max(_SUB, 32 // max(itemsize, 1))

    xf = input_data.reshape(-1)
    yf = output_data.reshape(-1)
    if (N % _LANE != 0) or (N < sub_mult * _LANE):
        # TODO(synk): rare ragged element count — this fallback materializes a
        # small zero-padded copy; the common (image) path never pads.
        n_view = max(sub_mult * _LANE, pl.cdiv(N, _LANE) * _LANE)
        xf = jnp.pad(xf, (0, n_view - N))
        yf = jnp.pad(yf, (0, n_view - N))
    else:
        n_view = N

    rows = n_view // _LANE
    x2 = xf.reshape(rows, _LANE)   # free reshape of contiguous data
    y2 = yf.reshape(rows, _LANE)

    def _round_down(v, m):
        return max(m, (v // m) * m)

    # --- block-size selection ---
    r_blk = min(block_rows, _round_down(rows, sub_mult))
    # Keep 2 inputs x 2 pipeline buffers comfortably under VMEM (v7x: 64 MiB/TC).
    r_blk = min(r_blk, _round_down((40 * 2 ** 20) // (4 * _LANE * itemsize), sub_mult))
    # Give each core split >= 2 steps so the double buffer actually pipelines.
    if rows >= 2 * num_splits * sub_mult:
        r_blk = min(r_blk, _round_down(rows // (2 * num_splits), sub_mult))
    r_blk = max(r_blk, sub_mult)

    acc_r = _round_down(min(acc_rows, r_blk), sub_mult)   # accumulator slab rows
    r_blk = _round_down(r_blk, acc_r)                     # r_blk multiple of acc_r
    n_slabs = r_blk // acc_r
    unroll = max(1, min(8, n_slabs))

    n_chunks = pl.cdiv(rows, r_blk)
    num_splits = min(num_splits, n_chunks)
    n_inner = pl.cdiv(n_chunks, num_splits)
    need_mask = (num_splits * n_inner * r_blk) != rows

    if num_splits * n_inner == n_chunks:
        def in_map(c, i):
            return (c * n_inner + i, 0)
    else:
        def in_map(c, i):
            # Clamp so the DMA never walks past the last valid block; the
            # in-kernel row mask zeroes the duplicated contribution.
            return (jnp.minimum(c * n_inner + i, n_chunks - 1), 0)

    kernel = functools.partial(
        _ae_mse_kernel, rows_total=rows, r_blk=r_blk, acc_rows=acc_r,
        n_inner=n_inner, need_mask=need_mask, unroll=unroll)

    blk_bytes = r_blk * _LANE * itemsize
    out_bytes = num_splits * acc_r * _LANE * 4
    vmem_limit = int(min(64 * 2 ** 20,
                         max(32 * 2 ** 20,
                             4 * blk_bytes + 2 * out_bytes + 8 * 2 ** 20)))

    cost = pl.CostEstimate(
        flops=3 * n_view, transcendentals=0,
        bytes_accessed=2 * n_view * itemsize + out_bytes)

    partials = pl.pallas_call(
        kernel,
        out_shape=jax.ShapeDtypeStruct((num_splits * acc_r, _LANE), jnp.float32),
        grid_spec=pltpu.PrefetchScalarGridSpec(
            num_scalar_prefetch=0,
            grid=(num_splits, n_inner),
            in_specs=[
                pl.BlockSpec((r_blk, _LANE), in_map),
                pl.BlockSpec((r_blk, _LANE), in_map),
            ],
            out_specs=pl.BlockSpec((acc_r, _LANE), lambda c, i: (c, 0)),
        ),
        compiler_params=pltpu.CompilerParams(
            dimension_semantics=("parallel", "arbitrary"),
            vmem_limit_bytes=vmem_limit,
        ),
        cost_estimate=cost,
    )(x2, y2)

    # Final cross-lane reduce + 0.5/B scale in the wrapper (tiny).
    return (0.5 / B) * jnp.sum(partials)


if __name__ == "__main__":
    key = jax.random.PRNGKey(0)
    ks = jax.random.split(key, 10)

    def ref_loss(x, y):
        xs = x.astype(jnp.float32)
        ys = y.astype(jnp.float32)
        axes = tuple(range(1, x.ndim))
        return 0.5 * jnp.mean(jnp.sum((xs - ys) ** 2, axis=axes))

    # Case 1: canonical small NCHW shape, forced through the Pallas kernel.
    x1 = jax.random.normal(ks[0], (2, 4, 16, 16), dtype=jnp.float32)
    y1 = jax.random.normal(ks[1], (2, 4, 16, 16), dtype=jnp.float32)
    got1 = ae_loss_mse(x1, y1, allow_fast_path=False)
    jax.block_until_ready(got1)
    assert jnp.allclose(got1, ref_loss(x1, y1), rtol=1e-5, atol=1e-5), (got1, ref_loss(x1, y1))

    # Case 2: partial last block -> gated edge-mask path, single split.
    x2 = jax.random.normal(ks[2], (2, 4, 32, 48), dtype=jnp.float32)
    y2 = jax.random.normal(ks[3], (2, 4, 32, 48), dtype=jnp.float32)
    got2 = ae_loss_mse(x2, y2, block_rows=40, num_core_splits=1, allow_fast_path=False)
    jax.block_until_ready(got2)
    assert jnp.allclose(got2, ref_loss(x2, y2), rtol=1e-5, atol=1e-5), (got2, ref_loss(x2, y2))

    # Case 3: forced 2-way core split with a clamped duplicate (fully masked) block.
    x3 = jax.random.normal(ks[4], (2, 4, 32, 44), dtype=jnp.float32)
    y3 = jax.random.normal(ks[5], (2, 4, 32, 44), dtype=jnp.float32)
    got3 = ae_loss_mse(x3, y3, block_rows=8, num_core_splits=2, allow_fast_path=False)
    jax.block_until_ready(got3)
    assert jnp.allclose(got3, ref_loss(x3, y3), rtol=1e-5, atol=1e-5), (got3, ref_loss(x3, y3))

    # Case 4: bf16 inputs (16-row sublane tiling); kernel casts to f32 in-register.
    x4 = jax.random.normal(ks[6], (2, 4, 32, 48), dtype=jnp.bfloat16)
    y4 = jax.random.normal(ks[7], (2, 4, 32, 48), dtype=jnp.bfloat16)
    got4 = ae_loss_mse(x4, y4, allow_fast_path=False)
    jax.block_until_ready(got4)
    assert jnp.allclose(got4, ref_loss(x4, y4), rtol=2e-3, atol=1e-2), (got4, ref_loss(x4, y4))

    # Case 5: ragged element count (padded kernel path) and the XLA fast path.
    x5 = jax.random.normal(ks[8], (2, 3, 5, 7), dtype=jnp.float32)
    y5 = jax.random.normal(ks[9], (2, 3, 5, 7), dtype=jnp.float32)
    got5 = ae_loss_mse(x5, y5, allow_fast_path=False)
    got5_fast = ae_loss_mse(x5, y5)
    jax.block_until_ready((got5, got5_fast))
    assert jnp.allclose(got5, ref_loss(x5, y5), rtol=1e-5, atol=1e-5), (got5, ref_loss(x5, y5))
    assert jnp.allclose(got5_fast, ref_loss(x5, y5), rtol=1e-5, atol=1e-5), (got5_fast, ref_loss(x5, y5))

    print("KERNEL_OK")
</pallas_src>

<mosaic_0001>
module attributes {stable_mosaic.version = 11 : i64} {
  func.func @_ae_mse_kernel(%arg0: i32, %arg1: i32, %arg2: memref<8x128xf32, #tpu.memory_space<vmem>>, %arg3: memref<8x128xf32, #tpu.memory_space<vmem>>, %arg4: memref<8x128xf32, #tpu.memory_space<vmem>>) attributes {dimension_semantics = [#tpu.dimension_semantics<parallel>, #tpu.dimension_semantics<arbitrary>], iteration_bounds = array<i64: 1, 2>, scalar_prefetch = 0 : i64, scratch_operands = 0 : i64, tpu.core_type = #tpu.core_type<tc>, window_params = [{transform_indices = @transform_0, window_bounds = array<i64: 8, 128>}, {transform_indices = @transform_1, window_bounds = array<i64: 8, 128>}, {transform_indices = @transform_2, window_bounds = array<i64: 8, 128>}]} {
    %c0_i32 = arith.constant 0 : i32
    %0 = arith.cmpi eq, %arg1, %c0_i32 : i32
    %1 = arith.extui %0 : i1 to i32
    %c0_i32_0 = arith.constant 0 : i32
    %2 = arith.cmpi ne, %1, %c0_i32_0 : i32
    scf.if %2 {
      %cst_7 = arith.constant 0.000000e+00 : f32
      %16 = vector.broadcast %cst_7 : f32 to vector<8x128xf32>
      %c0_8 = arith.constant 0 : index
      %c0_9 = arith.constant 0 : index
      %17 = vector.load %arg4[%c0_8, %c0_9] : memref<8x128xf32, #tpu.memory_space<vmem>>, vector<8x128xf32>
      tpu.vector_store %arg4[%c0_8, %c0_9], %16 {strides = array<i32>} : memref<8x128xf32, #tpu.memory_space<vmem>>, vector<8x128xf32>,
    } else {
    }
    %cst = arith.constant 0.000000e+00 : f32
    %3 = vector.broadcast %cst : f32 to vector<8x128xf32>
    %c0_i32_1 = arith.constant 0 : i32
    %c8_i32 = arith.constant 8 : i32
    %4 = arith.muli %c0_i32_1, %c8_i32 : i32
    %5 = tpu.assume_multiple %4, 8 : i32
    %6 = arith.index_cast %5 : i32 to index
    %c0 = arith.constant 0 : index
    %7 = vector.load %arg2[%6, %c0] : memref<8x128xf32, #tpu.memory_space<vmem>>, vector<8x128xf32>
    %8 = arith.index_cast %5 : i32 to index
    %c0_2 = arith.constant 0 : index
    %9 = vector.load %arg3[%8, %c0_2] : memref<8x128xf32, #tpu.memory_space<vmem>>, vector<8x128xf32>
    %10 = arith.subf %7, %9 : vector<8x128xf32>
    %11 = arith.mulf %10, %10 : vector<8x128xf32>
    %12 = arith.addf %3, %11 : vector<8x128xf32>
    %c1_i32 = arith.constant 1 : i32
    %c0_3 = arith.constant 0 : index
    %c0_4 = arith.constant 0 : index
    %13 = vector.load %arg4[%c0_3, %c0_4] : memref<8x128xf32, #tpu.memory_space<vmem>>, vector<8x128xf32>
    %14 = arith.addf %13, %12 : vector<8x128xf32>
    %c0_5 = arith.constant 0 : index
    %c0_6 = arith.constant 0 : index
    %15 = vector.load %arg4[%c0_5, %c0_6] : memref<8x128xf32, #tpu.memory_space<vmem>>, vector<8x128xf32>
    tpu.vector_store %arg4[%c0_5, %c0_6], %14 {strides = array<i32>} : memref<8x128xf32, #tpu.memory_space<vmem>>, vector<8x128xf32>,
    return
  }
  func.func @transform_0(%arg0: i32, %arg1: i32) -> (i32, i32) {
    %c2_i32 = arith.constant 2 : i32
    %0 = arith.muli %arg0, %c2_i32 : i32
    %1 = arith.addi %0, %arg1 : i32
    %c0_i32 = arith.constant 0 : i32
    %c0_i32_0 = arith.constant 0 : i32
    return %1, %c0_i32 : i32, i32
  }
  func.func @transform_1(%arg0: i32, %arg1: i32) -> (i32, i32) {
    %c2_i32 = arith.constant 2 : i32
    %0 = arith.muli %arg0, %c2_i32 : i32
    %1 = arith.addi %0, %arg1 : i32
    %c0_i32 = arith.constant 0 : i32
    %c0_i32_0 = arith.constant 0 : i32
    return %1, %c0_i32 : i32, i32
  }
  func.func @transform_2(%arg0: i32, %arg1: i32) -> (i32, i32) {
    %c0_i32 = arith.constant 0 : i32
    %c0_i32_0 = arith.constant 0 : i32
    return %arg0, %c0_i32 : i32, i32
  }
}

</mosaic_0001>

<llo_original>
// kernel: tpu_custom_call.1
$region0: #{tpu_custom_call.1}
  #allocation0 [shape = 'u32[]', space=smem, size = 0x4, offset = 0x4, fixed_abs, tag = 'smem constant byte address 0x4 - core index']
  #allocation1 [shape = 'u32[144,128]{1,0:T(1,128)}', space=vmem, size = 0x12000, scoped, tag = 'internal scratch']
  %s0 = inlined_call_operand.hbm [shape: f32[16,128], index: 0, kind: input, shape index: {}]
  %s1 = inlined_call_operand.hbm [shape: f32[16,128], index: 1, kind: input, shape index: {}]
  %s2 = inlined_call_operand.hbm [shape: f32[8,128], index: 2, kind: output, shape index: {}]
  %s3 = sld [smem:[#allocation0]]
  $region53: #{tpu_custom_call.1} parent=0
    _
  %s5 = ssub.s32 1, %s3
  %s6 = scalar_select 0, %s5, %s3
  $region1: #{tpu_custom_call.1} parent=0
    #allocation2 [shape = 'u8[8192]{0}', space=vmem, size = 0x2000, scoped, tag = 'input window, operand 0']
    #allocation3 [shape = 's32[2]{0}', space=sflag, size = 0x8, scoped, tag = 'scoped memory for tpu_custom_call.1']
    #allocation4 [shape = 's32[2]{0}', space=sflag, size = 0x8, scoped, tag = 'scoped memory for tpu_custom_call.1']
    #allocation5 [shape = 'u8[8192]{0}', space=vmem, size = 0x2000, scoped, tag = 'input window, operand 1']
    #allocation6 [shape = 's32[2]{0}', space=sflag, size = 0x8, scoped, tag = 'scoped memory for tpu_custom_call.1']
    #allocation7 [shape = 'u8[4096]{0}', space=vmem, size = 0x1000, scoped, tag = 'output window, operand 0, single buffered']
    %7 = vsyncpa [#allocation3], 0
    %s8 = scalar_lea.sflag [#allocation3], 1
    %9 = vsyncpa %s8, 0
    %10 = vsyncpa [#allocation6], 0
    %s11 = scalar_lea.sflag [#allocation6], 1
    %12 = vsyncpa %s11, 0
    %13 = vsyncpa [#allocation4], 0
    loop: start=0, step=1, limit=4
    $region2: #{tpu_custom_call.1} parent=1 // loop_pre_header
      _
    $region3: #{tpu_custom_call.1} parent=1 // loop_header
      %s15 = sphi 0, %s19
      %p16 = scmp.ge.s32.totalorder %s15, 4
      %s22 = sphi 0, %s34
      %s23 = sphi 0, %s30
      %s24 = sphi 0, %s22
      %s25 = sphi 0, %s23
      %s26 = sphi 0, %s24
      %s27 = sphi 0, %s25
      %s41 = sphi 0, %s43
      %s44 = sphi 0, %s41
      %s45 = sphi 0, %s44
      %s61 = sphi 0, %s45
      %s71 = sphi 0, %s73
      %s74 = sphi 0, %s71
      %s75 = sphi 0, %s74
      %s91 = sphi 0, %s75
      %s97 = sphi 0, %s99
      %s100 = sphi 0, %s97
      %s101 = sphi 0, %s100
      %s117 = sphi 0, %s101
    $region4: #{tpu_custom_call.1} parent=1 // loop_header_branch
      %18 = sbr.rel (%p16) target = $region8
    $region5: #{tpu_custom_call.1} parent=1 // loop_body
      %s20 = ssub.s32 %s15, 1
      %s21 = ssub.s32 %s15, 2
      %s28 = sadd.s32 1, %s23
      %p29 = scmp.ge.s32.totalorder %s28, 2
      %s30 = scalar_select %p29, 0, %s28
      %s31 = sadd.s32 1, %s22
      %s32 = scalar_select %p29, %s31, %s22
      %p33 = scmp.ge.s32.totalorder %s32, 1
      %s34 = scalar_select %p33, 0, %s32
      %s35 = smul.u32 %s22, 2
      %s36 = sadd.s32 %s35, %s23
      %s37 = smul.u32 %s34, 2
      %s38 = sadd.s32 %s37, %s30
      %s39 = ssub.s32 %s36, %s38
      %p40 = scmp.eq.s32.totalorder %s39, 0
      %s42 = sadd.s32 %s41, 1
      %s43 = scalar_select %p40, %s41, %s42
      %p46 = pneg %p40
      %p47 = scmp.eq.s32.totalorder %s15, 1
      %p48 = por %p46, %p47
      %p49 = scmp.ne.s32.totalorder %s41, %s44
      %p50 = scmp.eq.s32.totalorder %s15, 0
      %p51 = por %p49, %p50
      %p52 = scmp.ne.s32.totalorder %s41, %s44
      %p53 = scmp.eq.s32.totalorder %s20, 1
      %p54 = por %p52, %p53
      %p55 = scmp.ne.s32.totalorder %s44, %s45
      %p56 = scmp.eq.s32.totalorder %s20, 0
      %p57 = por %p55, %p56
      %p58 = scmp.ne.s32.totalorder %s44, %s45
      %p59 = scmp.eq.s32.totalorder %s21, 1
      %p60 = por %p58, %p59
      %p62 = scmp.ne.s32.totalorder %s45, %s61
      %p63 = scmp.eq.s32.totalorder %s21, 0
      %p64 = por %p62, %p63
      %s65 = smul.u32 %s22, 2
      %s66 = sadd.s32 %s65, %s23
      %s67 = smul.u32 %s34, 2
      %s68 = sadd.s32 %s67, %s30
      %s69 = ssub.s32 %s66, %s68
      %p70 = scmp.eq.s32.totalorder %s69, 0
      %s72 = sadd.s32 %s71, 1
      %s73 = scalar_select %p70, %s71, %s72
      %p76 = pneg %p70
      %p77 = scmp.eq.s32.totalorder %s15, 1
      %p78 = por %p76, %p77
      %p79 = scmp.ne.s32.totalorder %s71, %s74
      %p80 = scmp.eq.s32.totalorder %s15, 0
      %p81 = por %p79, %p80
      %p82 = scmp.ne.s32.totalorder %s71, %s74
      %p83 = scmp.eq.s32.totalorder %s20, 1
      %p84 = por %p82, %p83
      %p85 = scmp.ne.s32.totalorder %s74, %s75
      %p86 = scmp.eq.s32.totalorder %s20, 0
      %p87 = por %p85, %p86
      %p88 = scmp.ne.s32.totalorder %s74, %s75
      %p89 = scmp.eq.s32.totalorder %s21, 1
      %p90 = por %p88, %p89
      %p92 = scmp.ne.s32.totalorder %s75, %s91
      %p93 = scmp.eq.s32.totalorder %s21, 0
      %p94 = por %p92, %p93
      %s95 = ssub.s32 %s22, %s34
      %p96 = scmp.eq.s32.totalorder %s95, 0
      %s98 = sadd.s32 %s97, 1
      %s99 = scalar_select %p96, %s97, %s98
      %p102 = pneg %p96
      %p103 = scmp.eq.s32.totalorder %s15, 1
      %p104 = por %p102, %p103
      %p105 = scmp.ne.s32.totalorder %s97, %s100
      %p106 = scmp.eq.s32.totalorder %s15, 0
      %p107 = por %p105, %p106
      %p108 = scmp.ne.s32.totalorder %s97, %s100
      %p109 = scmp.eq.s32.totalorder %s20, 1
      %p110 = por %p108, %p109
      %p111 = scmp.ne.s32.totalorder %s100, %s101
      %p112 = scmp.eq.s32.totalorder %s20, 0
      %p113 = por %p111, %p112
      %p114 = scmp.ne.s32.totalorder %s100, %s101
      %p115 = scmp.eq.s32.totalorder %s21, 1
      %p116 = por %p114, %p115
      %p118 = scmp.ne.s32.totalorder %s101, %s117
      %p119 = scmp.eq.s32.totalorder %s21, 0
      %p120 = por %p118, %p119
      %p121 = scmp.le.s32.totalorder 1, %s15
      %p122 = scmp.lt.s32.totalorder %s15, 3
      %p123 = pnand %p121, %p122
      %p124 = pneg %p123
      // Predicated region
      $region9: #{tpu_custom_call.1} parent=5 // pred_check
        _
      $region10: #{tpu_custom_call.1} parent=5 // pred_check_branch
        %126 = sbr.rel (%p123) target = $region12
      $region11: #{tpu_custom_call.1} parent=5 // pred_region
        %s127 = ssub.s32 %s15, 1
      $region12: #{tpu_custom_call.1} parent=5 // pred_fallthru
        _
      %p128 = scmp.lt.s32.totalorder %s15, 2
      // Predicated region
      $region13: #{tpu_custom_call.1} parent=5 // pred_check
        %p129 = pneg %p128
      $region14: #{tpu_custom_call.1} parent=5 // pred_check_branch
        %131 = sbr.rel (%p129) target = $region16
      $region15: #{tpu_custom_call.1} parent=5 // pred_region
        // Predicated region
        $region17: #{tpu_custom_call.1} parent=15 // pred_check
          %p132 = pneg %p51
        $region18: #{tpu_custom_call.1} parent=15 // pred_check_branch
          %134 = sbr.rel (%p132) target = $region20
        $region19: #{tpu_custom_call.1} parent=15 // pred_region
          %s135 = sand.u32 %s41, 1
          %s136 = scalar_lea.sflag [#allocation3], %s135
          %s137 = sand.u32 %s41, 1
          %s138 = smul.addr %s137, 8
          %s139 = scalar_lea.vmem [#allocation2], %s138
          %s140 = smul.u32 %s22, 2
          %s141 = sadd.s32 %s140, %s23
          %s143 = ssub.s32 128, 128
          %144 = vsyncadd %s136, %s143
          %s145 = smul.addr %s141, 128
          %s146 = scalar_lea.hbm %s0, %s145
          %s148 = sshll.u32 %s139, 4
          %s149 = int_to_ptr.vmem [resolvable:$true] %s148
          %151 = dma.hbm_to_vmem [thread:$0]  %s146, 128, %s149, %s136
        $region20: #{tpu_custom_call.1} parent=15 // pred_fallthru
          _
        // Predicated region
        $region21: #{tpu_custom_call.1} parent=15 // pred_check
          %p152 = pneg %p81
        $region22: #{tpu_custom_call.1} parent=15 // pred_check_branch
          %154 = sbr.rel (%p152) target = $region24
        $region23: #{tpu_custom_call.1} parent=15 // pred_region
          %s155 = sand.u32 %s71, 1
          %s156 = scalar_lea.sflag [#allocation6], %s155
          %s157 = sand.u32 %s71, 1
          %s158 = smul.addr %s157, 8
          %s159 = scalar_lea.vmem [#allocation5], %s158
          %s160 = smul.u32 %s22, 2
          %s161 = sadd.s32 %s160, %s23
          %s163 = ssub.s32 128, 128
          %164 = vsyncadd %s156, %s163
          %s165 = smul.addr %s161, 128
          %s166 = scalar_lea.hbm %s1, %s165
          %s168 = sshll.u32 %s159, 4
          %s169 = int_to_ptr.vmem [resolvable:$true] %s168
          %171 = dma.hbm_to_vmem [thread:$0]  %s166, 128, %s169, %s156
        $region24: #{tpu_custom_call.1} parent=15 // pred_fallthru
          _
      $region16: #{tpu_custom_call.1} parent=5 // pred_fallthru
        _
      %p172 = scmp.le.s32.totalorder 1, %s15
      %p173 = scmp.lt.s32.totalorder %s15, 3
      %p174 = pnand %p172, %p173
      %p175 = pneg %p174
      // Predicated region
      $region25: #{tpu_custom_call.1} parent=5 // pred_check
        _
      $region26: #{tpu_custom_call.1} parent=5 // pred_check_branch
        %177 = sbr.rel (%p174) target = $region28
      $region27: #{tpu_custom_call.1} parent=5 // pred_region
        %s178 = ssub.s32 %s15, 1
        %s179 = sand.u32 %s44, 1
        %s180 = scalar_lea.sflag [#allocation3], %s179
        %s181 = sand.u32 %s44, 1
        %s182 = smul.addr %s181, 8
        %s183 = scalar_lea.vmem [#allocation2], %s182
        // Predicated region
        $region29: #{tpu_custom_call.1} parent=27 // pred_check
          %p184 = pneg %p57
        $region30: #{tpu_custom_call.1} parent=27 // pred_check_branch
          %186 = sbr.rel (%p184) target = $region32
        $region31: #{tpu_custom_call.1} parent=27 // pred_region
          %187 = dma.done %s180, 128
        $region32: #{tpu_custom_call.1} parent=27 // pred_fallthru
          _
        %s188 = sand.u32 %s74, 1
        %s189 = scalar_lea.sflag [#allocation6], %s188
        %s190 = sand.u32 %s74, 1
        %s191 = smul.addr %s190, 8
        %s192 = scalar_lea.vmem [#allocation5], %s191
        // Predicated region
        $region33: #{tpu_custom_call.1} parent=27 // pred_check
          %p193 = pneg %p87
        $region34: #{tpu_custom_call.1} parent=27 // pred_check_branch
          %195 = sbr.rel (%p193) target = $region36
        $region35: #{tpu_custom_call.1} parent=27 // pred_region
          %196 = dma.done %s189, 128
        $region36: #{tpu_custom_call.1} parent=27 // pred_fallthru
          _
        %s197 = sand.u32 %s44, 1
        %s198 = scalar_lea.sflag [#allocation3], %s197
        %s199 = sand.u32 %s44, 1
        %s200 = smul.addr %s199, 8
        %s201 = scalar_lea.vmem [#allocation2], %s200
        %p202 = pneg %p57
        %p203 = pneg %p54
        %s204 = sand.u32 %s74, 1
        %s205 = scalar_lea.sflag [#allocation6], %s204
        %s206 = sand.u32 %s74, 1
        %s207 = smul.addr %s206, 8
        %s208 = scalar_lea.vmem [#allocation5], %s207
        %p209 = pneg %p87
        %p210 = pneg %p84
        %p211 = pneg %p113
        %p212 = pneg %p110
        %s213 = smul.u32 %s24, 2
        %s214 = sadd.s32 %s213, %s25
        %s215 = smul.u32 %s24, 2
        %s216 = sadd.s32 %s215, %s25
        %p217 = scmp.eq.s32.totalorder %s25, 0
        // Predicated region
        $region37: #{tpu_custom_call.1} parent=27 // pred_check
          %p218 = pneg %p217
        $region38: #{tpu_custom_call.1} parent=27 // pred_check_branch
          %220 = sbr.rel (%p218) target = $region40
        $region39: #{tpu_custom_call.1} parent=27 // pred_region
          %221 = vst [vmem:[#allocation7] sm:$0xff] 0.0
        $region40: #{tpu_custom_call.1} parent=27 // pred_fallthru
          _
        %v222 = vld [vmem:[%s183] sm:$0xff]
        %v223 = vld [vmem:[%s192] sm:$0xff]
        %v224 = vsub.f32 %v222, %v223
        %v225 = vmul.f32 %v224, %v224
        %v226 = vadd.f32 %v225, 0.0
        %v227 = vld [vmem:[#allocation7] sm:$0xff]
        %v228 = vadd.f32 %v227, %v226
        %229 = vst [vmem:[#allocation7] sm:$0xff] %v228
        // Predicated region
        $region41: #{tpu_custom_call.1} parent=27 // pred_check
          %p230 = pneg %p110
        $region42: #{tpu_custom_call.1} parent=27 // pred_check_branch
          %232 = sbr.rel (%p230) target = $region44
        $region43: #{tpu_custom_call.1} parent=27 // pred_region
          %s234 = ssub.s32 128, 128
          %235 = vsyncadd [#allocation4], %s234
          %s236 = smul.addr %s24, 128
          %s237 = scalar_lea.hbm %s2, %s236
          %s239 = sshll.u32 [#allocation7], 4
          %s240 = int_to_ptr.vmem [resolvable:$true] %s239
          %242 = dma.vmem_to_hbm [thread:$0]  %s240, 128, %s237, [#allocation4]
        $region44: #{tpu_custom_call.1} parent=27 // pred_fallthru
          _
        // Predicated region
        $region45: #{tpu_custom_call.1} parent=27 // pred_check
          %p243 = pneg %p110
        $region46: #{tpu_custom_call.1} parent=27 // pred_check_branch
          %245 = sbr.rel (%p243) target = $region48
        $region47: #{tpu_custom_call.1} parent=27 // pred_region
          %246 = dma.done [#allocation4], 128
        $region48: #{tpu_custom_call.1} parent=27 // pred_fallthru
          _
      $region28: #{tpu_custom_call.1} parent=5 // pred_fallthru
        _
      %p247 = scmp.le.s32.totalorder 2, %s15
      // Predicated region
      $region49: #{tpu_custom_call.1} parent=5 // pred_check
        %p248 = pneg %p247
      $region50: #{tpu_custom_call.1} parent=5 // pred_check_branch
        %250 = sbr.rel (%p248) target = $region52
      $region51: #{tpu_custom_call.1} parent=5 // pred_region
        %s251 = ssub.s32 %s15, 2
      $region52: #{tpu_custom_call.1} parent=5 // pred_fallthru
        _
    $region6: #{tpu_custom_call.1} parent=1 // loop_footer
      %s19 = sadd.s32 1, %s15
    $region7: #{tpu_custom_call.1} parent=1 // loop_footer_branch
      %14 = sbr.rel target = $region3
    $region8: #{tpu_custom_call.1} parent=1 // loop_exit
      _
    %252 = vsyncpa [#allocation3], 1
    %s253 = scalar_lea.sflag [#allocation3], 1
    %254 = vsyncpa %s253, 1
    %255 = vsyncpa [#allocation6], 1
    %s256 = scalar_lea.sflag [#allocation6], 1
    %257 = vsyncpa %s256, 1
    %258 = vsyncpa [#allocation4], 1
    %s259 = scalar_lea.sflag [#allocation4], 1
    %260 = vsyncpa %s259, 1

</llo_original>
